<compile_context>
chip_gen: v5e
topology: v5e:2x2
jax: 0.10.0
libtpu: 0.0.40
codegen_flags: <defaults>
</compile_context>

<pallas_src>
import functools

import jax
import jax.numpy as jnp
import numpy as np
from jax.experimental import pallas as pl
from jax.experimental.pallas import tpu as pltpu


# --------------------------------------------------------------------------- #
# Kernels
# --------------------------------------------------------------------------- #
def _dem_fused_kernel(x_ref, w1t_ref, b1_ref, w2_ref, b2_ref, o_ref, *, inv_hw):
    """Single pass over one full (C, HW) plane: pool + channel MLP + apply."""
    x = x_ref[...]                                   # (C, HW)
    xf = x.astype(jnp.float32)

    # Global avg + max pool over the spatial (lane) axis.
    s = (jnp.sum(xf, axis=-1, keepdims=True) * inv_hw
         + jnp.max(xf, axis=-1, keepdims=True))      # (C, 1)

    # Tiny channel MLP on VPU/XLU (broadcast-mul + reduce; no MXU).
    h = jnp.sum(w1t_ref[...] * s, axis=0, keepdims=True) + b1_ref[...]  # (1, Cr)
    h = jnp.maximum(h, 0.0)
    a = jnp.sum(w2_ref[...] * h, axis=1, keepdims=True) + b2_ref[...]   # (C, 1)
    att = jax.nn.sigmoid(a)

    # Enhance: x * (1 + attention), broadcast over the lane (HW) axis.
    o_ref[...] = (xf * (1.0 + att)).astype(o_ref.dtype)


def _dem_pool_kernel(x_ref, sum_ref, max_ref):
    """Tiled phase 1: accumulate per-channel sum / max across HW tiles.

    hw_tile divides HW exactly (enforced in the wrapper), so there is no
    padded-region garbage in the reductions.
    """
    t = pl.program_id(1)
    xf = x_ref[...].astype(jnp.float32)              # (C, hw_tile)
    ps = jnp.sum(xf, axis=-1, keepdims=True)         # (C, 1)
    pm = jnp.max(xf, axis=-1, keepdims=True)         # (C, 1)

    @pl.when(t == 0)
    def _():
        sum_ref[...] = ps
        max_ref[...] = pm

    @pl.when(t != 0)
    def _():
        sum_ref[...] = sum_ref[...] + ps
        max_ref[...] = jnp.maximum(max_ref[...], pm)


def _dem_apply_kernel(sum_ref, max_ref, w1t_ref, b1_ref, w2_ref, b2_ref,
                      x_ref, o_ref, *, inv_hw):
    """Tiled phase 2: recompute the (tiny) attention and apply it to an x tile."""
    s = sum_ref[...] * inv_hw + max_ref[...]                            # (C, 1)
    h = jnp.sum(w1t_ref[...] * s, axis=0, keepdims=True) + b1_ref[...]  # (1, Cr)
    h = jnp.maximum(h, 0.0)
    a = jnp.sum(w2_ref[...] * h, axis=1, keepdims=True) + b2_ref[...]   # (C, 1)
    att = jax.nn.sigmoid(a)
    o_ref[...] = (x_ref[...].astype(jnp.float32) * (1.0 + att)).astype(o_ref.dtype)


# --------------------------------------------------------------------------- #
# Wrapper
# --------------------------------------------------------------------------- #
_FUSED_VMEM_BUDGET = 32 * 1024 * 1024   # combined double-buffered fused blocks
_TILE_VMEM_BUDGET = 8 * 1024 * 1024     # per-step budget for the tiled path


def _vmem_limit(bytes_needed):
    # Explicit scoped-VMEM limit derived from actual block sizes (+ margin),
    # capped at v7x's physical 64 MiB.
    return int(min(max(bytes_needed + (2 << 20), 8 << 20), 64 << 20))


def _pick_hw_tile(hw, c, elt):
    """Largest multiple of 128 dividing HW whose in+out double-buffered tiles fit."""
    best = None
    t = 128
    while t <= hw:
        if hw % t == 0 and 4 * c * t * elt <= _TILE_VMEM_BUDGET:
            best = t
        t += 128
    return best


def differential_enhancive_module(x_nchw, w1, b1, w2, b2, *, hw_tile=None):
    """x_nchw: (B, C, H, W).
    w1: (Cr, C) = fc1.weight[:, :, 0, 0], b1: (Cr,)
    w2: (C, Cr) = fc2.weight[:, :, 0, 0], b2: (C,)
    """
    B, C, H, W = x_nchw.shape
    Cr = w1.shape[0]
    HW = H * W
    elt = x_nchw.dtype.itemsize
    inv_hw = float(1.0 / HW)

    # Free reshape: NCHW bytes are already (B, C, HW)-contiguous. No transposes;
    # HW lands on the lane axis (lane-dense when HW % 128 == 0).
    x_k = x_nchw.reshape(B, C, HW)
    w1t = jnp.transpose(w1)          # (C, Cr) -- tiny, one-off
    b1_2d = b1.reshape(1, Cr)
    w2_2d = w2.reshape(C, Cr)
    b2_2d = b2.reshape(C, 1)
    param_bytes = int((w1t.size + b1_2d.size + w2_2d.size + b2_2d.size) * elt)

    plane_bytes = C * HW * elt
    fused_vmem = 4 * plane_bytes + 2 * param_bytes   # in + out, double-buffered

    if hw_tile is None:
        if fused_vmem <= _FUSED_VMEM_BUDGET:
            hw_tile = 0                               # use fused path
        else:
            hw_tile = _pick_hw_tile(HW, C, elt) or 0
            # Falls back to the whole-plane fused block (with a raised VMEM
            # limit) only if HW has no multiple-of-128 divisor that fits.
    else:
        if HW % hw_tile != 0 or (hw_tile % 128 != 0 and hw_tile != HW):
            raise ValueError("hw_tile must divide H*W and be a multiple of 128")

    if hw_tile == 0:
        # ---------------- fused single-pass path ---------------- #
        out_k = pl.pallas_call(
            functools.partial(_dem_fused_kernel, inv_hw=inv_hw),
            out_shape=jax.ShapeDtypeStruct((B, C, HW), x_k.dtype),
            grid=(B,),
            in_specs=[
                pl.BlockSpec((None, C, HW), lambda b: (b, 0, 0)),   # x plane
                pl.BlockSpec((C, Cr), lambda b: (0, 0)),            # w1^T
                pl.BlockSpec((1, Cr), lambda b: (0, 0)),            # b1
                pl.BlockSpec((C, Cr), lambda b: (0, 0)),            # w2
                pl.BlockSpec((C, 1), lambda b: (0, 0)),             # b2
            ],
            out_specs=pl.BlockSpec((None, C, HW), lambda b: (b, 0, 0)),
            compiler_params=pltpu.CompilerParams(
                dimension_semantics=("parallel",),
                vmem_limit_bytes=_vmem_limit(fused_vmem),
            ),
            cost_estimate=pl.CostEstimate(
                flops=int(4 * B * C * HW + 4 * B * C * Cr),
                transcendentals=int(B * C),
                bytes_accessed=int(2 * B * plane_bytes + param_bytes),
            ),
        )(x_k, w1t, b1_2d, w2_2d, b2_2d)
        return out_k.reshape(B, C, H, W)

    # ---------------- tiled two-phase path (large planes / v7x) ---------------- #
    n_t = HW // hw_tile
    tile_bytes = C * hw_tile * elt

    # Phase 1: per-channel sum / max, reduction (HW-tile) axis last, 'arbitrary'.
    sums, maxs = pl.pallas_call(
        _dem_pool_kernel,
        out_shape=(jax.ShapeDtypeStruct((B, C, 1), jnp.float32),
                   jax.ShapeDtypeStruct((B, C, 1), jnp.float32)),
        grid=(B, n_t),
        in_specs=[pl.BlockSpec((None, C, hw_tile), lambda b, t: (b, 0, t))],
        out_specs=(pl.BlockSpec((None, C, 1), lambda b, t: (b, 0, 0)),
                   pl.BlockSpec((None, C, 1), lambda b, t: (b, 0, 0))),
        compiler_params=pltpu.CompilerParams(
            dimension_semantics=("parallel", "arbitrary"),
            vmem_limit_bytes=_vmem_limit(2 * tile_bytes + 16 * C * elt),
        ),
        cost_estimate=pl.CostEstimate(
            flops=int(2 * B * C * HW),
            transcendentals=0,
            bytes_accessed=int(B * plane_bytes + 8 * B * C),
        ),
    )(x_k)

    # Phase 2: re-read x tiles, recompute the tiny attention, apply. Fully parallel.
    out_k = pl.pallas_call(
        functools.partial(_dem_apply_kernel, inv_hw=inv_hw),
        out_shape=jax.ShapeDtypeStruct((B, C, HW), x_k.dtype),
        grid=(B, n_t),
        in_specs=[
            pl.BlockSpec((None, C, 1), lambda b, t: (b, 0, 0)),        # sum
            pl.BlockSpec((None, C, 1), lambda b, t: (b, 0, 0)),        # max
            pl.BlockSpec((C, Cr), lambda b, t: (0, 0)),                # w1^T
            pl.BlockSpec((1, Cr), lambda b, t: (0, 0)),                # b1
            pl.BlockSpec((C, Cr), lambda b, t: (0, 0)),                # w2
            pl.BlockSpec((C, 1), lambda b, t: (0, 0)),                 # b2
            pl.BlockSpec((None, C, hw_tile), lambda b, t: (b, 0, t)),  # x tile
        ],
        out_specs=pl.BlockSpec((None, C, hw_tile), lambda b, t: (b, 0, t)),
        compiler_params=pltpu.CompilerParams(
            dimension_semantics=("parallel", "parallel"),
            vmem_limit_bytes=_vmem_limit(4 * tile_bytes + 2 * param_bytes
                                         + 16 * C * elt),
        ),
        cost_estimate=pl.CostEstimate(
            flops=int(2 * B * C * HW + 4 * B * C * Cr * n_t),
            transcendentals=int(B * C * n_t),
            bytes_accessed=int(2 * B * plane_bytes + param_bytes),
        ),
    )(sums, maxs, w1t, b1_2d, w2_2d, b2_2d, x_k)
    return out_k.reshape(B, C, H, W)


# --------------------------------------------------------------------------- #
# Reference + test
# --------------------------------------------------------------------------- #
def _reference(x_nchw, w1, b1, w2, b2):
    # Plain-JAX mirror of the PyTorch forward (1x1 convs == channel MLP).
    avg = jnp.mean(x_nchw, axis=(2, 3))              # (B, C)
    mx = jnp.max(x_nchw, axis=(2, 3))                # (B, C)
    s = avg + mx
    h = jnp.maximum(s @ w1.T + b1, 0.0)              # (B, Cr)
    a = jax.nn.sigmoid(h @ w2.T + b2)                # (B, C)
    return x_nchw * (1.0 + a)[:, :, None, None]


if __name__ == "__main__":
    # in_channels must be >= 16 so that C // 16 >= 1 (module spec).
    B, C, H, W = 2, 32, 16, 16
    Cr = max(C // 16, 1)

    key = jax.random.PRNGKey(0)
    kx, kw1, kb1, kw2, kb2 = jax.random.split(key, 5)

    x = jax.random.normal(kx, (B, C, H, W), dtype=jnp.float32)
    # PyTorch conv weights (out, in, 1, 1) stored squeezed to 2-D.
    w1 = jax.random.normal(kw1, (Cr, C), dtype=jnp.float32) * 0.1   # fc1.weight
    b1 = jax.random.normal(kb1, (Cr,), dtype=jnp.float32) * 0.1
    w2 = jax.random.normal(kw2, (C, Cr), dtype=jnp.float32) * 0.1   # fc2.weight
    b2 = jax.random.normal(kb2, (C,), dtype=jnp.float32) * 0.1

    ref = _reference(x, w1, b1, w2, b2)

    # Fused single-pass path (plane fits VMEM).
    out_fused = jax.block_until_ready(
        differential_enhancive_module(x, w1, b1, w2, b2))
    np.testing.assert_allclose(np.asarray(out_fused), np.asarray(ref),
                               rtol=1e-5, atol=1e-5)

    # Tiled two-phase fallback path (forced here with hw_tile=128 -> 2 HW tiles).
    out_tiled = jax.block_until_ready(
        differential_enhancive_module(x, w1, b1, w2, b2, hw_tile=128))
    np.testing.assert_allclose(np.asarray(out_tiled), np.asarray(ref),
                               rtol=1e-5, atol=1e-5)

    print("KERNEL_OK")
</pallas_src>

<mosaic_0001>
module attributes {stable_mosaic.version = 11 : i64} {
  func.func @_dem_fused_kernel(%arg0: i32, %arg1: memref<1x32x256xf32, #tpu.memory_space<vmem>>, %arg2: memref<32x2xf32, #tpu.memory_space<vmem>>, %arg3: memref<1x2xf32, #tpu.memory_space<vmem>>, %arg4: memref<32x2xf32, #tpu.memory_space<vmem>>, %arg5: memref<32x1xf32, #tpu.memory_space<vmem>>, %arg6: memref<1x32x256xf32, #tpu.memory_space<vmem>>) attributes {dimension_semantics = [#tpu.dimension_semantics<parallel>], iteration_bounds = array<i64: 2>, scalar_prefetch = 0 : i64, scratch_operands = 0 : i64, tpu.core_type = #tpu.core_type<tc>, window_params = [{transform_indices = @transform_0, window_bounds = array<i64: 1, 32, 256>}, {pipeline_mode = #tpu.pipeline_mode<synchronous>, transform_indices = @transform_1, window_bounds = array<i64: 32, 2>}, {pipeline_mode = #tpu.pipeline_mode<synchronous>, transform_indices = @transform_2, window_bounds = array<i64: 1, 2>}, {pipeline_mode = #tpu.pipeline_mode<synchronous>, transform_indices = @transform_3, window_bounds = array<i64: 32, 2>}, {pipeline_mode = #tpu.pipeline_mode<synchronous>, transform_indices = @transform_4, window_bounds = array<i64: 32, 1>}, {transform_indices = @transform_5, window_bounds = array<i64: 1, 32, 256>}]} {
    %c0 = arith.constant 0 : index
    %c0_0 = arith.constant 0 : index
    %c0_1 = arith.constant 0 : index
    %0 = vector.load %arg1[%c0, %c0_0, %c0_1] : memref<1x32x256xf32, #tpu.memory_space<vmem>>, vector<1x32x256xf32>
    %1 = vector.shape_cast %0 : vector<1x32x256xf32> to vector<32x256xf32>
    %cst = arith.constant dense<0.000000e+00> : vector<32xf32>
    %2 = vector.multi_reduction <add>, %1, %cst [1] : vector<32x256xf32> to vector<32xf32>
    %3 = vector.shape_cast %2 : vector<32xf32> to vector<32x1xf32>
    %cst_2 = arith.constant 3.906250e-03 : f32
    %4 = vector.broadcast %cst_2 : f32 to vector<32x1xf32>
    %5 = arith.mulf %3, %4 : vector<32x1xf32>
    %cst_3 = arith.constant dense<0xFF800000> : vector<32xf32>
    %6 = vector.multi_reduction <maximumf>, %1, %cst_3 [1] : vector<32x256xf32> to vector<32xf32>
    %7 = vector.shape_cast %6 : vector<32xf32> to vector<32x1xf32>
    %8 = arith.addf %5, %7 : vector<32x1xf32>
    %c0_4 = arith.constant 0 : index
    %c0_5 = arith.constant 0 : index
    %9 = vector.load %arg2[%c0_4, %c0_5] : memref<32x2xf32, #tpu.memory_space<vmem>>, vector<32x2xf32>
    %10 = vector.broadcast %8 : vector<32x1xf32> to vector<32x2xf32>
    %11 = arith.mulf %9, %10 : vector<32x2xf32>
    %cst_6 = arith.constant dense<0.000000e+00> : vector<2xf32>
    %12 = vector.multi_reduction <add>, %11, %cst_6 [0] : vector<32x2xf32> to vector<2xf32>
    %13 = vector.shape_cast %12 : vector<2xf32> to vector<1x2xf32>
    %c0_7 = arith.constant 0 : index
    %c0_8 = arith.constant 0 : index
    %14 = vector.load %arg3[%c0_7, %c0_8] : memref<1x2xf32, #tpu.memory_space<vmem>>, vector<1x2xf32>
    %15 = arith.addf %13, %14 : vector<1x2xf32>
    %cst_9 = arith.constant 0.000000e+00 : f32
    %16 = vector.broadcast %cst_9 : f32 to vector<1x2xf32>
    %17 = arith.maximumf %15, %16 : vector<1x2xf32>
    %c0_10 = arith.constant 0 : index
    %c0_11 = arith.constant 0 : index
    %18 = vector.load %arg4[%c0_10, %c0_11] : memref<32x2xf32, #tpu.memory_space<vmem>>, vector<32x2xf32>
    %19 = vector.broadcast %17 : vector<1x2xf32> to vector<32x2xf32>
    %20 = arith.mulf %18, %19 : vector<32x2xf32>
    %cst_12 = arith.constant dense<0.000000e+00> : vector<32xf32>
    %21 = vector.multi_reduction <add>, %20, %cst_12 [1] : vector<32x2xf32> to vector<32xf32>
    %22 = vector.shape_cast %21 : vector<32xf32> to vector<32x1xf32>
    %c0_13 = arith.constant 0 : index
    %c0_14 = arith.constant 0 : index
    %23 = vector.load %arg5[%c0_13, %c0_14] : memref<32x1xf32, #tpu.memory_space<vmem>>, vector<32x1xf32>
    %24 = arith.addf %22, %23 : vector<32x1xf32>
    %25 = arith.negf %24 : vector<32x1xf32>
    %26 = math.exp %25 : vector<32x1xf32>
    %cst_15 = arith.constant 1.000000e+00 : f32
    %27 = vector.broadcast %cst_15 : f32 to vector<32x1xf32>
    %28 = arith.addf %27, %26 : vector<32x1xf32>
    %29 = arith.divf %27, %28 : vector<32x1xf32>
    %cst_16 = arith.constant 1.000000e+00 : f32
    %30 = vector.broadcast %cst_16 : f32 to vector<32x1xf32>
    %31 = arith.addf %30, %29 : vector<32x1xf32>
    %32 = vector.broadcast %31 : vector<32x1xf32> to vector<32x256xf32>
    %33 = arith.mulf %1, %32 : vector<32x256xf32>
    %c0_17 = arith.constant 0 : index
    %c0_18 = arith.constant 0 : index
    %c0_19 = arith.constant 0 : index
    %34 = vector.load %arg6[%c0_17, %c0_18, %c0_19] : memref<1x32x256xf32, #tpu.memory_space<vmem>>, vector<1x32x256xf32>
    %35 = vector.shape_cast %34 : vector<1x32x256xf32> to vector<32x256xf32>
    %36 = vector.shape_cast %33 : vector<32x256xf32> to vector<1x32x256xf32>
    tpu.vector_store %arg6[%c0_17, %c0_18, %c0_19], %36 {strides = array<i32>} : memref<1x32x256xf32, #tpu.memory_space<vmem>>, vector<1x32x256xf32>,
    return
  }
  func.func @transform_0(%arg0: i32) -> (i32, i32, i32) {
    %c0_i32 = arith.constant 0 : i32
    %c0_i32_0 = arith.constant 0 : i32
    %c0_i32_1 = arith.constant 0 : i32
    return %arg0, %c0_i32, %c0_i32_0 : i32, i32, i32
  }
  func.func @transform_1(%arg0: i32) -> (i32, i32) {
    %c0_i32 = arith.constant 0 : i32
    %c0_i32_0 = arith.constant 0 : i32
    %c0_i32_1 = arith.constant 0 : i32
    return %c0_i32, %c0_i32_0 : i32, i32
  }
  func.func @transform_2(%arg0: i32) -> (i32, i32) {
    %c0_i32 = arith.constant 0 : i32
    %c0_i32_0 = arith.constant 0 : i32
    %c0_i32_1 = arith.constant 0 : i32
    return %c0_i32, %c0_i32_0 : i32, i32
  }
  func.func @transform_3(%arg0: i32) -> (i32, i32) {
    %c0_i32 = arith.constant 0 : i32
    %c0_i32_0 = arith.constant 0 : i32
    %c0_i32_1 = arith.constant 0 : i32
    return %c0_i32, %c0_i32_0 : i32, i32
  }
  func.func @transform_4(%arg0: i32) -> (i32, i32) {
    %c0_i32 = arith.constant 0 : i32
    %c0_i32_0 = arith.constant 0 : i32
    %c0_i32_1 = arith.constant 0 : i32
    return %c0_i32, %c0_i32_0 : i32, i32
  }
  func.func @transform_5(%arg0: i32) -> (i32, i32, i32) {
    %c0_i32 = arith.constant 0 : i32
    %c0_i32_0 = arith.constant 0 : i32
    %c0_i32_1 = arith.constant 0 : i32
    return %arg0, %c0_i32, %c0_i32_0 : i32, i32, i32
  }
}

</mosaic_0001>

<llo_original>
// kernel: tpu_custom_call.1
$region0: #{tpu_custom_call.1}
  #allocation0 [shape = 'u32[]', space=smem, size = 0x4, offset = 0x4, fixed_abs, tag = 'smem constant byte address 0x4 - core index']
  #allocation1 [shape = 'u32[72,128]{1,0:T(1,128)}', space=vmem, size = 0x9000, scoped, tag = 'internal scratch']
  %s0 = inlined_call_operand.hbm [shape: f32[2,32,256], index: 0, kind: input, shape index: {}]
  %s1 = inlined_call_operand.vmem [shape: f32[32,2], index: 1, kind: input, shape index: {}]
  %s2 = inlined_call_operand.vmem [shape: f32[1,2], index: 2, kind: input, shape index: {}]
  %s3 = inlined_call_operand.vmem [shape: f32[32,2], index: 3, kind: input, shape index: {}]
  %s4 = inlined_call_operand.vmem [shape: f32[32,1], index: 4, kind: input, shape index: {}]
  %s5 = inlined_call_operand.hbm [shape: f32[2,32,256], index: 5, kind: output, shape index: {}]
  %s6 = sld [smem:[#allocation0]]
  $region57: #{tpu_custom_call.1} parent=0
    _
  %s8 = ssub.s32 1, %s6
  %s9 = scalar_select 0, %s8, %s6
  $region1: #{tpu_custom_call.1} parent=0
    #allocation2 [shape = 'u8[65536]{0}', space=vmem, size = 0x10000, scoped, tag = 'input window, operand 0']
    #allocation3 [shape = 's32[2]{0}', space=sflag, size = 0x8, scoped, tag = 'scoped memory for tpu_custom_call.1']
    #allocation4 [shape = 's32[2]{0}', space=sflag, size = 0x8, scoped, tag = 'scoped memory for tpu_custom_call.1']
    #allocation5 [shape = 'u8[65536]{0}', space=vmem, size = 0x10000, scoped, tag = 'output window, operand 0']
    %10 = vsyncpa [#allocation3], 0
    %s11 = scalar_lea.sflag [#allocation3], 1
    %12 = vsyncpa %s11, 0
    %13 = vsyncpa [#allocation4], 0
    %s14 = scalar_lea.sflag [#allocation4], 1
    %15 = vsyncpa %s14, 0
    loop: start=0, step=1, limit=4
    $region2: #{tpu_custom_call.1} parent=1 // loop_pre_header
      _
    $region3: #{tpu_custom_call.1} parent=1 // loop_header
      %s17 = sphi 0, %s21
      %p18 = scmp.ge.s32.totalorder %s17, 4
      %s27 = sphi 0, %s29
      %s30 = sphi 0, %s27
      %s31 = sphi 0, %s30
      %s47 = sphi 0, %s31
      %s51 = sphi 0, %s51
      %s53 = sphi 0, %s51
      %s54 = sphi 0, %s53
      %s68 = sphi 0, %s54
      %s72 = sphi 0, %s72
      %s74 = sphi 0, %s72
      %s75 = sphi 0, %s74
      %s89 = sphi 0, %s75
      %s93 = sphi 0, %s93
      %s95 = sphi 0, %s93
      %s96 = sphi 0, %s95
      %s110 = sphi 0, %s96
      %s114 = sphi 0, %s114
      %s116 = sphi 0, %s114
      %s117 = sphi 0, %s116
      %s131 = sphi 0, %s117
      %s137 = sphi 0, %s139
      %s140 = sphi 0, %s137
      %s141 = sphi 0, %s140
      %s157 = sphi 0, %s141
    $region4: #{tpu_custom_call.1} parent=1 // loop_header_branch
      %20 = sbr.rel (%p18) target = $region8
    $region5: #{tpu_custom_call.1} parent=1 // loop_body
      %s22 = ssub.s32 %s17, 1
      %s23 = ssub.s32 %s17, 2
      %s24 = sadd.s32 %s17, 1
      %s25 = ssub.s32 %s17, %s24
      %p26 = scmp.eq.s32.totalorder %s25, 0
      %s28 = sadd.s32 %s27, 1
      %s29 = scalar_select %p26, %s27, %s28
      %p32 = pneg %p26
      %p33 = scmp.eq.s32.totalorder %s17, 1
      %p34 = por %p32, %p33
      %p35 = scmp.ne.s32.totalorder %s27, %s30
      %p36 = scmp.eq.s32.totalorder %s17, 0
      %p37 = por %p35, %p36
      %p38 = scmp.ne.s32.totalorder %s27, %s30
      %p39 = scmp.eq.s32.totalorder %s22, 1
      %p40 = por %p38, %p39
      %p41 = scmp.ne.s32.totalorder %s30, %s31
      %p42 = scmp.eq.s32.totalorder %s22, 0
      %p43 = por %p41, %p42
      %p44 = scmp.ne.s32.totalorder %s30, %s31
      %p45 = scmp.eq.s32.totalorder %s23, 1
      %p46 = por %p44, %p45
      %p48 = scmp.ne.s32.totalorder %s31, %s47
      %p49 = scmp.eq.s32.totalorder %s23, 0
      %p50 = por %p48, %p49
      %s52 = sadd.s32 %s51, 1
      %p55 = scmp.eq.s32.totalorder %s17, 1
      %p56 = scmp.ne.s32.totalorder %s51, %s53
      %p57 = scmp.eq.s32.totalorder %s17, 0
      %p58 = por %p56, %p57
      %p59 = scmp.ne.s32.totalorder %s51, %s53
      %p60 = scmp.eq.s32.totalorder %s22, 1
      %p61 = por %p59, %p60
      %p62 = scmp.ne.s32.totalorder %s53, %s54
      %p63 = scmp.eq.s32.totalorder %s22, 0
      %p64 = por %p62, %p63
      %p65 = scmp.ne.s32.totalorder %s53, %s54
      %p66 = scmp.eq.s32.totalorder %s23, 1
      %p67 = por %p65, %p66
      %p69 = scmp.ne.s32.totalorder %s54, %s68
      %p70 = scmp.eq.s32.totalorder %s23, 0
      %p71 = por %p69, %p70
      %s73 = sadd.s32 %s72, 1
      %p76 = scmp.eq.s32.totalorder %s17, 1
      %p77 = scmp.ne.s32.totalorder %s72, %s74
      %p78 = scmp.eq.s32.totalorder %s17, 0
      %p79 = por %p77, %p78
      %p80 = scmp.ne.s32.totalorder %s72, %s74
      %p81 = scmp.eq.s32.totalorder %s22, 1
      %p82 = por %p80, %p81
      %p83 = scmp.ne.s32.totalorder %s74, %s75
      %p84 = scmp.eq.s32.totalorder %s22, 0
      %p85 = por %p83, %p84
      %p86 = scmp.ne.s32.totalorder %s74, %s75
      %p87 = scmp.eq.s32.totalorder %s23, 1
      %p88 = por %p86, %p87
      %p90 = scmp.ne.s32.totalorder %s75, %s89
      %p91 = scmp.eq.s32.totalorder %s23, 0
      %p92 = por %p90, %p91
      %s94 = sadd.s32 %s93, 1
      %p97 = scmp.eq.s32.totalorder %s17, 1
      %p98 = scmp.ne.s32.totalorder %s93, %s95
      %p99 = scmp.eq.s32.totalorder %s17, 0
      %p100 = por %p98, %p99
      %p101 = scmp.ne.s32.totalorder %s93, %s95
      %p102 = scmp.eq.s32.totalorder %s22, 1
      %p103 = por %p101, %p102
      %p104 = scmp.ne.s32.totalorder %s95, %s96
      %p105 = scmp.eq.s32.totalorder %s22, 0
      %p106 = por %p104, %p105
      %p107 = scmp.ne.s32.totalorder %s95, %s96
      %p108 = scmp.eq.s32.totalorder %s23, 1
      %p109 = por %p107, %p108
      %p111 = scmp.ne.s32.totalorder %s96, %s110
      %p112 = scmp.eq.s32.totalorder %s23, 0
      %p113 = por %p111, %p112
      %s115 = sadd.s32 %s114, 1
      %p118 = scmp.eq.s32.totalorder %s17, 1
      %p119 = scmp.ne.s32.totalorder %s114, %s116
      %p120 = scmp.eq.s32.totalorder %s17, 0
      %p121 = por %p119, %p120
      %p122 = scmp.ne.s32.totalorder %s114, %s116
      %p123 = scmp.eq.s32.totalorder %s22, 1
      %p124 = por %p122, %p123
      %p125 = scmp.ne.s32.totalorder %s116, %s117
      %p126 = scmp.eq.s32.totalorder %s22, 0
      %p127 = por %p125, %p126
      %p128 = scmp.ne.s32.totalorder %s116, %s117
      %p129 = scmp.eq.s32.totalorder %s23, 1
      %p130 = por %p128, %p129
      %p132 = scmp.ne.s32.totalorder %s117, %s131
      %p133 = scmp.eq.s32.totalorder %s23, 0
      %p134 = por %p132, %p133
      %s135 = ssub.s32 %s17, %s24
      %p136 = scmp.eq.s32.totalorder %s135, 0
      %s138 = sadd.s32 %s137, 1
      %s139 = scalar_select %p136, %s137, %s138
      %p142 = pneg %p136
      %p143 = scmp.eq.s32.totalorder %s17, 1
      %p144 = por %p142, %p143
      %p145 = scmp.ne.s32.totalorder %s137, %s140
      %p146 = scmp.eq.s32.totalorder %s17, 0
      %p147 = por %p145, %p146
      %p148 = scmp.ne.s32.totalorder %s137, %s140
      %p149 = scmp.eq.s32.totalorder %s22, 1
      %p150 = por %p148, %p149
      %p151 = scmp.ne.s32.totalorder %s140, %s141
      %p152 = scmp.eq.s32.totalorder %s22, 0
      %p153 = por %p151, %p152
      %p154 = scmp.ne.s32.totalorder %s140, %s141
      %p155 = scmp.eq.s32.totalorder %s23, 1
      %p156 = por %p154, %p155
      %p158 = scmp.ne.s32.totalorder %s141, %s157
      %p159 = scmp.eq.s32.totalorder %s23, 0
      %p160 = por %p158, %p159
      %p161 = scmp.le.s32.totalorder 1, %s17
      %p162 = scmp.lt.s32.totalorder %s17, 3
      %p163 = pnand %p161, %p162
      %p164 = pneg %p163
      // Predicated region
      $region9: #{tpu_custom_call.1} parent=5 // pred_check
        _
      $region10: #{tpu_custom_call.1} parent=5 // pred_check_branch
        %166 = sbr.rel (%p163) target = $region12
      $region11: #{tpu_custom_call.1} parent=5 // pred_region
        %s167 = ssub.s32 %s17, 1
        // Predicated region
        $region13: #{tpu_custom_call.1} parent=11 // pred_check
          %p168 = pneg %p64
        $region14: #{tpu_custom_call.1} parent=11 // pred_check_branch
          %170 = sbr.rel (%p168) target = $region16
        $region15: #{tpu_custom_call.1} parent=11 // pred_region
          _
        $region16: #{tpu_custom_call.1} parent=11 // pred_fallthru
          _
        // Predicated region
        $region17: #{tpu_custom_call.1} parent=11 // pred_check
          %p171 = pneg %p85
        $region18: #{tpu_custom_call.1} parent=11 // pred_check_branch
          %173 = sbr.rel (%p171) target = $region20
        $region19: #{tpu_custom_call.1} parent=11 // pred_region
          _
        $region20: #{tpu_custom_call.1} parent=11 // pred_fallthru
          _
        // Predicated region
        $region21: #{tpu_custom_call.1} parent=11 // pred_check
          %p174 = pneg %p106
        $region22: #{tpu_custom_call.1} parent=11 // pred_check_branch
          %176 = sbr.rel (%p174) target = $region24
        $region23: #{tpu_custom_call.1} parent=11 // pred_region
          _
        $region24: #{tpu_custom_call.1} parent=11 // pred_fallthru
          _
        // Predicated region
        $region25: #{tpu_custom_call.1} parent=11 // pred_check
          %p177 = pneg %p127
        $region26: #{tpu_custom_call.1} parent=11 // pred_check_branch
          %179 = sbr.rel (%p177) target = $region28
        $region27: #{tpu_custom_call.1} parent=11 // pred_region
          _
        $region28: #{tpu_custom_call.1} parent=11 // pred_fallthru
          _
      $region12: #{tpu_custom_call.1} parent=5 // pred_fallthru
        _
      %p180 = scmp.lt.s32.totalorder %s17, 2
      // Predicated region
      $region29: #{tpu_custom_call.1} parent=5 // pred_check
        %p181 = pneg %p180
      $region30: #{tpu_custom_call.1} parent=5 // pred_check_branch
        %183 = sbr.rel (%p181) target = $region32
      $region31: #{tpu_custom_call.1} parent=5 // pred_region
        // Predicated region
        $region33: #{tpu_custom_call.1} parent=31 // pred_check
          %p184 = pneg %p37
        $region34: #{tpu_custom_call.1} parent=31 // pred_check_branch
          %186 = sbr.rel (%p184) target = $region36
        $region35: #{tpu_custom_call.1} parent=31 // pred_region
          %s187 = sand.u32 %s27, 1
          %s188 = scalar_lea.sflag [#allocation3], %s187
          %s189 = sand.u32 %s27, 1
          %s190 = smul.addr %s189, 64
          %s191 = scalar_lea.vmem [#allocation2], %s190
          %193 = vsyncadd %s188, 0
          %s194 = smul.addr %s17, 8
          %s195 = smul.addr %s194, 8
          %s196 = scalar_lea.hbm %s0, %s195
          %s197 = sshll.u32 %s196, 4
          %s198 = int_to_ptr.hbm [resolvable:$true] %s197
          %s199 = sshll.u32 %s191, 4
          %s200 = int_to_ptr.vmem [resolvable:$true] %s199
          %205 = dma.hbm_to_vmem [thread:$0]  %s198, 1024, %s200, %s188, 256, 256, 16
        $region36: #{tpu_custom_call.1} parent=31 // pred_fallthru
          _
      $region32: #{tpu_custom_call.1} parent=5 // pred_fallthru
        _
      %p206 = scmp.le.s32.totalorder 1, %s17
      %p207 = scmp.lt.s32.totalorder %s17, 3
      %p208 = pnand %p206, %p207
      %p209 = pneg %p208
      // Predicated region
      $region37: #{tpu_custom_call.1} parent=5 // pred_check
        _
      $region38: #{tpu_custom_call.1} parent=5 // pred_check_branch
        %211 = sbr.rel (%p208) target = $region40
      $region39: #{tpu_custom_call.1} parent=5 // pred_region
        %s212 = ssub.s32 %s17, 1
        %s213 = sand.u32 %s30, 1
        %s214 = scalar_lea.sflag [#allocation3], %s213
        %s215 = sand.u32 %s30, 1
        %s216 = smul.addr %s215, 64
        %s217 = scalar_lea.vmem [#allocation2], %s216
        // Predicated region
        $region41: #{tpu_custom_call.1} parent=39 // pred_check
          %p218 = pneg %p43
        $region42: #{tpu_custom_call.1} parent=39 // pred_check_branch
          %220 = sbr.rel (%p218) target = $region44
        $region43: #{tpu_custom_call.1} parent=39 // pred_region
          %222 = dma.done %s214, 1024
        $region44: #{tpu_custom_call.1} parent=39 // pred_fallthru
          _
        %s223 = sand.u32 %s30, 1
        %s224 = scalar_lea.sflag [#allocation3], %s223
        %s225 = sand.u32 %s30, 1
        %s226 = smul.addr %s225, 64
        %s227 = scalar_lea.vmem [#allocation2], %s226
        %p228 = pneg %p43
        %p229 = pneg %p40
        %p230 = pneg %p64
        %p231 = pneg %p61
        %p232 = pneg %p85
        %p233 = pneg %p82
        %p234 = pneg %p106
        %p235 = pneg %p103
        %p236 = pneg %p127
        %p237 = pneg %p124
        %p238 = pneg %p153
        %p239 = pneg %p150
        %s240 = sand.u32 %s140, 1
        %s241 = scalar_lea.sflag [#allocation4], %s240
        %s242 = sand.u32 %s140, 1
        %s243 = smul.addr %s242, 64
        %s244 = scalar_lea.vmem [#allocation5], %s243
        %v245 = vld [vmem:[%s217] sm:$0xff]
        %v246 = vld [vmem:[%s217 + $0x8] sm:$0xff]
        %v247 = vld [vmem:[%s217 + $0x10] sm:$0xff]
        %v248 = vld [vmem:[%s217 + $0x18] sm:$0xff]
        %v249 = vld [vmem:[%s217 + $0x20] sm:$0xff]
        %v250 = vld [vmem:[%s217 + $0x28] sm:$0xff]
        %v251 = vld [vmem:[%s217 + $0x30] sm:$0xff]
        %v252 = vld [vmem:[%s217 + $0x38] sm:$0xff]
        %v253 = vadd.f32 %v245, %v246
        %254 = vadd.xlane.f32.xlu0 %v253
        %v255 = vpop.xlane.xlu0 %254
        %v256 = vadd.f32 %v247, %v248
        %257 = vadd.xlane.f32.xlu0 %v256
        %v258 = vpop.xlane.xlu0 %257
        %v259 = vadd.f32 %v249, %v250
        %260 = vadd.xlane.f32.xlu0 %v259
        %v261 = vpop.xlane.xlu0 %260
        %v262 = vadd.f32 %v251, %v252
        %263 = vadd.xlane.f32.xlu0 %v262
        %v264 = vpop.xlane.xlu0 %263
        %v265 = vmul.f32 %v255, 0.00390625
        %v266 = vmul.f32 %v258, 0.00390625
        %v267 = vmul.f32 %v261, 0.00390625
        %v268 = vmul.f32 %v264, 0.00390625
        %v269 = vmax.f32 %v245, %v246
        %270 = vmax.xlane.f32.xlu0 %v269
        %v271 = vpop.xlane.xlu0 %270
        %v272 = vmax.f32 %v247, %v248
        %273 = vmax.xlane.f32.xlu0 %v272
        %v274 = vpop.xlane.xlu0 %273
        %v275 = vmax.f32 %v249, %v250
        %276 = vmax.xlane.f32.xlu0 %v275
        %v277 = vpop.xlane.xlu0 %276
        %v278 = vmax.f32 %v251, %v252
        %279 = vmax.xlane.f32.xlu0 %v278
        %v280 = vpop.xlane.xlu0 %279
        %v281 = vadd.f32 %v265, %v271
        %v282 = vadd.f32 %v266, %v274
        %v283 = vadd.f32 %v267, %v277
        %v284 = vadd.f32 %v268, %v280
        %v285 = vld [vmem:[%s1] sm:$0xff]
        %v286 = vld [vmem:[%s1 + $0x8] sm:$0xff]
        %v287 = vld [vmem:[%s1 + $0x10] sm:$0xff]
        %v288 = vld [vmem:[%s1 + $0x18] sm:$0xff]
        %v289 = vmul.f32 %v285, %v281
        %v290 = vmul.f32 %v286, %v282
        %v291 = vmul.f32 %v287, %v283
        %v292 = vmul.f32 %v288, %v284
        %vm293 = vcmask 15360
        %v294 = vsel %vm293, %v289, 0.0
        %v295 = vsel %vm293, %v290, 0.0
        %v296 = vadd.f32 %v294, %v295
        %v297 = vsel %vm293, %v291, 0.0
        %v298 = vadd.f32 %v296, %v297
        %v299 = vsel %vm293, %v292, 0.0
        %v300 = vadd.f32 %v298, %v299
        %v301 = vrot.slane %v300, 4
        %v302 = vadd.f32 %v300, %v301
        %v303 = vrot.slane %v302, 2
        %v304 = vadd.f32 %v302, %v303
        %v305 = vrot.slane %v304, 1
        %v306 = vadd.f32 %v304, %v305
        %v307 = vld [vmem:[%s2] sm:$0x1]
        %v308 = vadd.f32 %v306, %v307
        %v309 = vmax.f32 %v308, 0.0
        %v310 = vld [vmem:[%s3] sm:$0xff]
        %v311 = vld [vmem:[%s3 + $0x8] sm:$0xff]
        %v312 = vld [vmem:[%s3 + $0x10] sm:$0xff]
        %v313 = vld [vmem:[%s3 + $0x18] sm:$0xff]
        %v314 = vperm.slane %v309, 0
        %v315 = vmul.f32 %v310, %v314
        %v316 = vmul.f32 %v311, %v314
        %v317 = vmul.f32 %v312, %v314
        %v318 = vmul.f32 %v313, %v314
        %v319 = vsel %vm293, %v315, 0.0
        %320 = vadd.xlane.f32.xlu0 %v319
        %v321 = vpop.xlane.xlu0 %320
        %v322 = vsel %vm293, %v316, 0.0
        %323 = vadd.xlane.f32.xlu0 %v322
        %v324 = vpop.xlane.xlu0 %323
        %v325 = vsel %vm293, %v317, 0.0
        %326 = vadd.xlane.f32.xlu0 %v325
        %v327 = vpop.xlane.xlu0 %326
        %v328 = vsel %vm293, %v318, 0.0
        %329 = vadd.xlane.f32.xlu0 %v328
        %v330 = vpop.xlane.xlu0 %329
        %v331 = vld [vmem:[%s4] sm:$0xff]
        %v332 = vld [vmem:[%s4 + $0x8] sm:$0xff]
        %v333 = vld [vmem:[%s4 + $0x10] sm:$0xff]
        %v334 = vld [vmem:[%s4 + $0x18] sm:$0xff]
        %v335 = vadd.f32 %v321, %v331
        %v336 = vadd.f32 %v324, %v332
        %v337 = vadd.f32 %v327, %v333
        %v338 = vadd.f32 %v330, %v334
        %v339 = vxor.u32 %v335, 2147483648
        %v340 = vxor.u32 %v336, 2147483648
        %v341 = vxor.u32 %v337, 2147483648
        %v342 = vxor.u32 %v338, 2147483648
        %v343 = vmul.f32 %v339, 1.442695
        %v344 = vpow.pop %v343
        %v345 = vmul.f32 %v340, 1.442695
        %v346 = vpow.pop %v345
        %v347 = vmul.f32 %v341, 1.442695
        %v348 = vpow.pop %v347
        %v349 = vmul.f32 %v342, 1.442695
        %v350 = vpow.pop %v349
        %v351 = vadd.f32 %v344, 1.0
        %v352 = vadd.f32 %v346, 1.0
        %v353 = vadd.f32 %v348, 1.0
        %v354 = vadd.f32 %v350, 1.0
        %v355 = vrcp.pop %v351
        %v356 = vmul.f32 %v351, %v355
        %v357 = vsub.f32 1.0, %v356
        %v358 = vmul.f32 %v355, %v357
        %v359 = vadd.f32 %v355, %v358
        %vm360 = vweird.f32 %v351
        %vm361 = vweird.f32 %v355
        %vm362 = vmor %vm360, %vm361
        %v363 = vsel %vm362, %v355, %v359
        %v364 = vand.u32 2147483647, %v351
        %vm365 = vcmp.eq.f32.partialorder %v364, 8.507059e+37
        %v366 = vand.u32 %v351, 2147483648
        %v367 = vor.u32 1.1754944e-38, %v366
        %v368 = vsel %vm365, %v367, %v363
        %v369 = vmul.f32 1.0, %v368
        %v370 = vrcp.pop %v352
        %v371 = vmul.f32 %v352, %v370
        %v372 = vsub.f32 1.0, %v371
        %v373 = vmul.f32 %v370, %v372
        %v374 = vadd.f32 %v370, %v373
        %vm375 = vweird.f32 %v352
        %vm376 = vweird.f32 %v370
        %vm377 = vmor %vm375, %vm376
        %v378 = vsel %vm377, %v370, %v374
        %v379 = vand.u32 2147483647, %v352
        %vm380 = vcmp.eq.f32.partialorder %v379, 8.507059e+37
        %v381 = vand.u32 %v352, 2147483648
        %v382 = vor.u32 1.1754944e-38, %v381
        %v383 = vsel %vm380, %v382, %v378
        %v384 = vmul.f32 1.0, %v383
        %v385 = vrcp.pop %v353
        %v386 = vmul.f32 %v353, %v385
        %v387 = vsub.f32 1.0, %v386
        %v388 = vmul.f32 %v385, %v387
        %v389 = vadd.f32 %v385, %v388
        %vm390 = vweird.f32 %v353
        %vm391 = vweird.f32 %v385
        %vm392 = vmor %vm390, %vm391
        %v393 = vsel %vm392, %v385, %v389
        %v394 = vand.u32 2147483647, %v353
        %vm395 = vcmp.eq.f32.partialorder %v394, 8.507059e+37
        %v396 = vand.u32 %v353, 2147483648
        %v397 = vor.u32 1.1754944e-38, %v396
        %v398 = vsel %vm395, %v397, %v393
        %v399 = vmul.f32 1.0, %v398
        %v400 = vrcp.pop %v354
        %v401 = vmul.f32 %v354, %v400
        %v402 = vsub.f32 1.0, %v401
        %v403 = vmul.f32 %v400, %v402
        %v404 = vadd.f32 %v400, %v403
        %vm405 = vweird.f32 %v354
        %vm406 = vweird.f32 %v400
        %vm407 = vmor %vm405, %vm406
        %v408 = vsel %vm407, %v400, %v404
        %v409 = vand.u32 2147483647, %v354
        %vm410 = vcmp.eq.f32.partialorder %v409, 8.507059e+37
        %v411 = vand.u32 %v354, 2147483648
        %v412 = vor.u32 1.1754944e-38, %v411
        %v413 = vsel %vm410, %v412, %v408
        %v414 = vmul.f32 1.0, %v413
        %v415 = vadd.f32 %v369, 1.0
        %v416 = vadd.f32 %v384, 1.0
        %v417 = vadd.f32 %v399, 1.0
        %v418 = vadd.f32 %v414, 1.0
        %420 = vset.pattern.permute.xlu0 0
        %421 = vperm.xlu0 %420, %v415
        %v422 = vpop.permute.xlu0 %421
        %425 = vset.pattern.permute.xlu0 0
        %426 = vperm.xlu0 %425, %v416
        %v427 = vpop.permute.xlu0 %426
        %430 = vset.pattern.permute.xlu0 0
        %431 = vperm.xlu0 %430, %v417
        %v432 = vpop.permute.xlu0 %431
        %435 = vset.pattern.permute.xlu0 0
        %436 = vperm.xlu0 %435, %v418
        %v437 = vpop.permute.xlu0 %436
        %v439 = vmul.f32 %v245, %v422
        %v440 = vmul.f32 %v246, %v422
        %v441 = vmul.f32 %v247, %v427
        %v442 = vmul.f32 %v248, %v427
        %v443 = vmul.f32 %v249, %v432
        %v444 = vmul.f32 %v250, %v432
        %v445 = vmul.f32 %v251, %v437
        %v446 = vmul.f32 %v252, %v437
        %447 = vst [vmem:[%s244] sm:$0xff] %v439
        %448 = vst [vmem:[%s244 + $0x8] sm:$0xff] %v440
        %449 = vst [vmem:[%s244 + $0x10] sm:$0xff] %v441
        %450 = vst [vmem:[%s244 + $0x18] sm:$0xff] %v442
        %451 = vst [vmem:[%s244 + $0x20] sm:$0xff] %v443
        %452 = vst [vmem:[%s244 + $0x28] sm:$0xff] %v444
        %453 = vst [vmem:[%s244 + $0x30] sm:$0xff] %v445
        %454 = vst [vmem:[%s244 + $0x38] sm:$0xff] %v446
        %s455 = sand.u32 %s140, 1
        %s456 = scalar_lea.sflag [#allocation4], %s455
        %s457 = sand.u32 %s140, 1
        %s458 = smul.addr %s457, 64
        %s459 = scalar_lea.vmem [#allocation5], %s458
        // Predicated region
        $region45: #{tpu_custom_call.1} parent=39 // pred_check
          %p460 = pneg %p150
        $region46: #{tpu_custom_call.1} parent=39 // pred_check_branch
          %462 = sbr.rel (%p460) target = $region48
        $region47: #{tpu_custom_call.1} parent=39 // pred_region
          %464 = vsyncadd %s456, 0
          %s465 = smul.addr %s22, 8
          %s466 = smul.addr %s465, 8
          %s467 = scalar_lea.hbm %s5, %s466
          %s468 = sshll.u32 %s459, 4
          %s469 = int_to_ptr.vmem [resolvable:$true] %s468
          %s470 = sshll.u32 %s467, 4
          %s471 = int_to_ptr.hbm [resolvable:$true] %s470
          %476 = dma.vmem_to_hbm [thread:$0]  %s469, 1024, %s471, %s456, 256, 256, 16
        $region48: #{tpu_custom_call.1} parent=39 // pred_fallthru
          _
      $region40: #{tpu_custom_call.1} parent=5 // pred_fallthru
        _
      %p477 = scmp.le.s32.totalorder 2, %s17
      // Predicated region
      $region49: #{tpu_custom_call.1} parent=5 // pred_check
        %p478 = pneg %p477
      $region50: #{tpu_custom_call.1} parent=5 // pred_check_branch
        %480 = sbr.rel (%p478) target = $region52
      $region51: #{tpu_custom_call.1} parent=5 // pred_region
        %s481 = ssub.s32 %s17, 2
        // Predicated region
        $region53: #{tpu_custom_call.1} parent=51 // pred_check
          %p482 = pneg %p156
        $region54: #{tpu_custom_call.1} parent=51 // pred_check_branch
          %484 = sbr.rel (%p482) target = $region56
        $region55: #{tpu_custom_call.1} parent=51 // pred_region
          %s485 = sand.u32 %s141, 1
          %s486 = scalar_lea.sflag [#allocation4], %s485
          %s487 = sand.u32 %s141, 1
          %s488 = smul.addr %s487, 64
          %s489 = scalar_lea.vmem [#allocation5], %s488
          %491 = dma.done %s486, 1024
        $region56: #{tpu_custom_call.1} parent=51 // pred_fallthru
          _
      $region52: #{tpu_custom_call.1} parent=5 // pred_fallthru
        _
    $region6: #{tpu_custom_call.1} parent=1 // loop_footer
      %s21 = sadd.s32 1, %s17
    $region7: #{tpu_custom_call.1} parent=1 // loop_footer_branch
      %16 = sbr.rel target = $region3
    $region8: #{tpu_custom_call.1} parent=1 // loop_exit
      _
    %492 = vsyncpa [#allocation3], 1
    %s493 = scalar_lea.sflag [#allocation3], 1
    %494 = vsyncpa %s493, 1
    %495 = vsyncpa [#allocation4], 1
    %s496 = scalar_lea.sflag [#allocation4], 1
    %497 = vsyncpa %s496, 1

</llo_original>
